<compile_context>
chip_gen: v7x
topology: tpu7x:2x2x1
jax: 0.10.0
libtpu: 0.0.40
codegen_flags: <defaults>
</compile_context>

<pallas_src>
import jax
import jax.numpy as jnp
from jax.experimental import pallas as pl
from jax.experimental.pallas import tpu as pltpu

EPS = 1e-10


# --------------------------------------------------------------------------- #
# Kernels
# --------------------------------------------------------------------------- #
def _l2norm_kernel(x_ref, o_ref):
    """Standard path: one row per sublane, full feature dim on lanes."""
    x = x_ref[...].astype(jnp.float32)
    ss = jnp.sum(x * x, axis=-1, keepdims=True)            # (tb, 1)
    inv = jax.lax.rsqrt(ss + EPS)                          # EUP rsqrt (free slot)
    o_ref[...] = (x * inv).astype(o_ref.dtype)


def _l2norm_packed_kernel(mask_ref, x_ref, o_ref):
    """Lane-dense path for D < 128: `128 // D` rows packed per 128-lane slab.

    Per-segment sum of squares is (x*x) @ M, with M the (128, 128) 0/1
    block-diagonal matrix (VMEM-resident constant input).  The matmul both
    reduces each lane segment and broadcasts the result back per lane, so all
    loads/stores stay lane-dense.  x*x is split hi/lo into bf16 so the MXU does
    two native bf16 passes with f32 accumulation (error ~2e-6, far below the
    1e-5 tolerance) instead of a 6-pass HIGHEST matmul.
    """
    x = x_ref[...].astype(jnp.float32)                     # (tb, 128)
    xsq = x * x
    hi = xsq.astype(jnp.bfloat16)                          # top 8 mantissa bits
    lo = (xsq - hi.astype(jnp.float32)).astype(jnp.bfloat16)
    m = mask_ref[...]                                      # (128, 128) bf16 0/1
    ss = (jnp.dot(hi, m, preferred_element_type=jnp.float32)
          + jnp.dot(lo, m, preferred_element_type=jnp.float32))   # (tb, 128)
    inv = jax.lax.rsqrt(ss + EPS)
    o_ref[...] = (x * inv).astype(o_ref.dtype)


# --------------------------------------------------------------------------- #
# Wrapper
# --------------------------------------------------------------------------- #
def _round_up(v, m):
    return -(-v // m) * m


def _pick_block_rows(num_rows, row_cost_bytes, target_tile_bytes):
    """Row-tile sizing.

    Big tiles to amortize the ~0.35 us/step overhead, multiples of 32 sublanes,
    and >= 4 grid steps (prefer 8/6/4) when that keeps tiles >= ~1 MiB, so both
    v7x TensorCores get multiple pipelined iterations.
    """
    if num_rows <= 64:
        return num_rows                                    # single tiny block
    max_rows = max(32, (target_tile_bytes // row_cost_bytes) // 32 * 32)
    min_rows = min(max_rows, max(32, ((1 << 20) // row_cost_bytes) // 32 * 32))
    block_rows = min(max_rows, max(32, (num_rows // 32) * 32))
    if pl.cdiv(num_rows, block_rows) < 4:
        for steps in (8, 6, 4):
            cand = _round_up(pl.cdiv(num_rows, steps), 32)
            if cand >= min_rows:
                block_rows = cand
                break
    return block_rows


def l2norm(x: jax.Array, *, target_tile_bytes: int = 4 << 20) -> jax.Array:
    """Row-wise L2 normalization of a (B, D) array, eps = 1e-10."""
    B0, D = x.shape
    dtype_bytes = jnp.dtype(x.dtype).itemsize

    # ---- Lane-dense packing for narrow feature dims (D < 128) -------------
    # Only when B0 % pack == 0 so a free contiguous reshape suffices (no pads,
    # no slices).  Otherwise fall back to the plain kernel: masked stores, but
    # zero extra HBM passes.
    # TODO(synk): handle the <= pack-1 remainder rows with a tiny second call
    # (and an aliased output) instead of falling back for the whole array.
    pack = 128 // D if (D < 128 and 128 % D == 0) else 1
    packed = pack > 1 and B0 % pack == 0
    if packed:
        Bp, Dp = B0 // pack, pack * D
        xw = x.reshape(Bp, Dp)           # contiguous regroup: metadata-only
    else:
        Bp, Dp = B0, D
        xw = x

    # ---- Row-tile sizing (budgeted by the in-kernel f32 working set) ------
    row_cost = Dp * max(dtype_bytes, 4)  # sub-f32 inputs are upcast in-kernel
    # TODO(synk): for rows wider than one tile (row_cost > target_tile_bytes),
    # add a second "arbitrary" grid axis over D with a scratch SS accumulator.
    block_rows = _pick_block_rows(Bp, row_cost, target_tile_bytes)
    grid = (pl.cdiv(Bp, block_rows),)

    # ---- VMEM limit: half of physical (64 MiB v5e/v6e, 32 MiB v7x) --------
    try:
        vmem_cap = pltpu.get_tpu_info().vmem_capacity_bytes
    except Exception:
        vmem_cap = 64 << 20
    vmem_limit = int(min(64 << 20, max(32 << 20, vmem_cap // 2)))

    compiler_params = pltpu.CompilerParams(
        dimension_semantics=("parallel",),
        vmem_limit_bytes=vmem_limit,
    )

    if packed:
        # Block-diagonal 0/1 mask, built once in the wrapper (constant-folded),
        # resident in VMEM for the whole grid (index map is constant).
        seg_idx = jnp.arange(128, dtype=jnp.int32) // D
        mask = (seg_idx[:, None] == seg_idx[None, :]).astype(jnp.bfloat16)
        out = pl.pallas_call(
            _l2norm_packed_kernel,
            out_shape=jax.ShapeDtypeStruct((Bp, Dp), x.dtype),
            grid=grid,
            in_specs=[
                pl.BlockSpec((128, 128), lambda i: (0, 0)),          # mask
                pl.BlockSpec((block_rows, Dp), lambda i: (i, 0)),    # x rows
            ],
            out_specs=pl.BlockSpec((block_rows, Dp), lambda i: (i, 0)),
            compiler_params=compiler_params,
            cost_estimate=pl.CostEstimate(
                flops=4 * Bp * 128 * 128 + 6 * Bp * Dp,   # two bf16 MXU passes
                transcendentals=Bp * 128,
                bytes_accessed=2 * Bp * Dp * dtype_bytes + 128 * 128 * 2,
            ),
        )(mask, xw)
        return out.reshape(B0, D)

    out = pl.pallas_call(
        _l2norm_kernel,
        out_shape=jax.ShapeDtypeStruct((Bp, Dp), x.dtype),
        grid=grid,
        in_specs=[pl.BlockSpec((block_rows, Dp), lambda i: (i, 0))],
        out_specs=pl.BlockSpec((block_rows, Dp), lambda i: (i, 0)),
        compiler_params=compiler_params,
        cost_estimate=pl.CostEstimate(
            flops=3 * Bp * Dp,
            transcendentals=Bp,
            bytes_accessed=2 * Bp * Dp * dtype_bytes,
        ),
    )(xw)
    return out


# --------------------------------------------------------------------------- #
# Reference + tests
# --------------------------------------------------------------------------- #
def _reference(x):
    # Pure-JAX reference matching the PyTorch forward exactly.
    norm = jnp.sqrt(jnp.sum(x[:, :, None] ** 2, axis=1) + EPS)   # (B, 1)
    return x / norm


if __name__ == "__main__":
    key = jax.random.PRNGKey(0)
    k1, k2, k3, k4 = jax.random.split(key, 4)

    # 1) Packed lane-dense path (D=32 < 128, B divisible by pack=4).
    x_small = jax.random.normal(k1, (8, 32), dtype=jnp.float32)
    out_small = jax.block_until_ready(l2norm(x_small))
    assert out_small.shape == x_small.shape and out_small.dtype == x_small.dtype
    assert jnp.allclose(out_small, _reference(x_small), atol=1e-5, rtol=1e-5), \
        "packed path mismatch"

    # 2) Standard path, D = 128, single block.
    x_big = jax.random.normal(k2, (64, 128), dtype=jnp.float32)
    out_big = jax.block_until_ready(l2norm(x_big))
    assert out_big.shape == x_big.shape and out_big.dtype == x_big.dtype
    assert jnp.allclose(out_big, _reference(x_big), atol=1e-5, rtol=1e-5), \
        "standard path mismatch"

    # 3) Non-divisible B -> partial final row block handled by Pallas
    #    (no wrapper padding / slicing anywhere).
    x_part = jax.random.normal(k3, (100, 256), dtype=jnp.float32)
    out_part = jax.block_until_ready(l2norm(x_part, target_tile_bytes=1 << 17))
    assert out_part.shape == x_part.shape
    assert jnp.allclose(out_part, _reference(x_part), atol=1e-5, rtol=1e-5), \
        "partial final block mismatch"

    # 4) D < 128 but B not divisible by pack -> plain-kernel fallback, no pads.
    x_frag = jax.random.normal(k4, (10, 32), dtype=jnp.float32)
    out_frag = jax.block_until_ready(l2norm(x_frag))
    assert out_frag.shape == x_frag.shape
    assert jnp.allclose(out_frag, _reference(x_frag), atol=1e-5, rtol=1e-5), \
        "narrow-D fallback mismatch"

    print("KERNEL_OK")
</pallas_src>

<mosaic_0001>
module attributes {stable_mosaic.version = 11 : i64} {
  func.func @_l2norm_packed_kernel(%arg0: i32, %arg1: memref<128x128xbf16, #tpu.memory_space<vmem>>, %arg2: memref<2x128xf32, #tpu.memory_space<vmem>>, %arg3: memref<2x128xf32, #tpu.memory_space<vmem>>) attributes {dimension_semantics = [#tpu.dimension_semantics<parallel>], iteration_bounds = array<i64: 1>, scalar_prefetch = 0 : i64, scratch_operands = 0 : i64, tpu.core_type = #tpu.core_type<tc>, window_params = [{pipeline_mode = #tpu.pipeline_mode<synchronous>, transform_indices = @transform_0, window_bounds = array<i64: 128, 128>}, {transform_indices = @transform_1, window_bounds = array<i64: 2, 128>}, {transform_indices = @transform_2, window_bounds = array<i64: 2, 128>}]} {
    %c0 = arith.constant 0 : index
    %c0_0 = arith.constant 0 : index
    %0 = vector.load %arg2[%c0, %c0_0] : memref<2x128xf32, #tpu.memory_space<vmem>>, vector<2x128xf32>
    %1 = arith.mulf %0, %0 : vector<2x128xf32>
    %2 = arith.truncf %1 : vector<2x128xf32> to vector<2x128xbf16>
    %3 = arith.extf %2 : vector<2x128xbf16> to vector<2x128xf32>
    %4 = arith.subf %1, %3 : vector<2x128xf32>
    %5 = arith.truncf %4 : vector<2x128xf32> to vector<2x128xbf16>
    %c0_1 = arith.constant 0 : index
    %c0_2 = arith.constant 0 : index
    %6 = vector.load %arg1[%c0_1, %c0_2] : memref<128x128xbf16, #tpu.memory_space<vmem>>, vector<128x128xbf16>
    %cst = arith.constant dense<0.000000e+00> : vector<2x128xf32>
    %7 = tpu.matmul %2, %6, %cst {dimension_numbers = #tpu.dot_dimension_numbers<[1], [0], [0], [1], [0, 0, 1, 1], [], []>} : vector<2x128xbf16>, vector<128x128xbf16>, vector<2x128xf32> -> vector<2x128xf32>
    %cst_3 = arith.constant dense<0.000000e+00> : vector<2x128xf32>
    %8 = tpu.matmul %5, %6, %cst_3 {dimension_numbers = #tpu.dot_dimension_numbers<[1], [0], [0], [1], [0, 0, 1, 1], [], []>} : vector<2x128xbf16>, vector<128x128xbf16>, vector<2x128xf32> -> vector<2x128xf32>
    %9 = arith.addf %7, %8 : vector<2x128xf32>
    %cst_4 = arith.constant 1.000000e-10 : f32
    %10 = vector.broadcast %cst_4 : f32 to vector<2x128xf32>
    %11 = arith.addf %9, %10 : vector<2x128xf32>
    %12 = math.rsqrt %11 : vector<2x128xf32>
    %13 = arith.mulf %0, %12 : vector<2x128xf32>
    %c0_5 = arith.constant 0 : index
    %c0_6 = arith.constant 0 : index
    %14 = vector.load %arg3[%c0_5, %c0_6] : memref<2x128xf32, #tpu.memory_space<vmem>>, vector<2x128xf32>
    tpu.vector_store %arg3[%c0_5, %c0_6], %13 {strides = array<i32>} : memref<2x128xf32, #tpu.memory_space<vmem>>, vector<2x128xf32>,
    return
  }
  func.func @transform_0(%arg0: i32) -> (i32, i32) {
    %c0_i32 = arith.constant 0 : i32
    %c0_i32_0 = arith.constant 0 : i32
    %c0_i32_1 = arith.constant 0 : i32
    return %c0_i32, %c0_i32_0 : i32, i32
  }
  func.func @transform_1(%arg0: i32) -> (i32, i32) {
    %c0_i32 = arith.constant 0 : i32
    %c0_i32_0 = arith.constant 0 : i32
    return %arg0, %c0_i32 : i32, i32
  }
  func.func @transform_2(%arg0: i32) -> (i32, i32) {
    %c0_i32 = arith.constant 0 : i32
    %c0_i32_0 = arith.constant 0 : i32
    return %arg0, %c0_i32 : i32, i32
  }
}

</mosaic_0001>

<llo_original>
// kernel: tpu_custom_call.1
$region0: #{tpu_custom_call.1}
  #allocation0 [shape = 'u32[]', space=smem, size = 0x4, offset = 0x4, fixed_abs, tag = 'smem constant byte address 0x4 - core index']
  #allocation1 [shape = 'u32[144,128]{1,0:T(1,128)}', space=vmem, size = 0x12000, scoped, tag = 'internal scratch']
  %s0 = inlined_call_operand.hbm [shape: bf16[128,128], index: 0, kind: input, shape index: {}]
  %s1 = inlined_call_operand.vmem [shape: f32[2,128], index: 1, kind: input, shape index: {}]
  %s2 = inlined_call_operand.hbm [shape: f32[2,128], index: 2, kind: output, shape index: {}]
  %s3 = sld [smem:[#allocation0]]
  $region22: #{tpu_custom_call.1} parent=0
    _
  %s5 = ssub.s32 1, %s3
  %s6 = scalar_select 0, %s5, %s3
  $region1: #{tpu_custom_call.1} parent=0
    #allocation2 [shape = 'u8[32768]{0}', space=vmem, size = 0x8000, scoped, tag = 'input window, operand 0, single buffered']
    #allocation3 [shape = 's32[1]{0}', space=sflag, size = 0x4, scoped, tag = 'scoped memory for tpu_custom_call.1']
    #allocation4 [shape = 's32[1]{0}', space=sflag, size = 0x4, scoped, tag = 'scoped memory for tpu_custom_call.1']
    #allocation5 [shape = 'u8[1024]{0}', space=vmem, size = 0x400, scoped, tag = 'output window, operand 0, single buffered']
    %7 = vsyncpa [#allocation3], 0
    %8 = vsyncpa [#allocation4], 0
    // Predicated region
    $region2: #{tpu_custom_call.1} parent=1 // pred_check
      _
    $region3: #{tpu_custom_call.1} parent=1 // pred_check_branch
      %10 = sbr.rel (0) target = $region5
    $region4: #{tpu_custom_call.1} parent=1 // pred_region
      %s12 = ssub.s32 1024, 1024
      %13 = vsyncadd [#allocation3], %s12
      %s14 = sshll.u32 [#allocation2], 4
      %s15 = int_to_ptr.vmem [resolvable:$true] %s14
      %20 = dma.hbm_to_vmem [thread:$0]  %s0, 1024, %s15, [#allocation3], 64, 64, 4
    $region5: #{tpu_custom_call.1} parent=1 // pred_fallthru
      _
    // Predicated region
    $region6: #{tpu_custom_call.1} parent=1 // pred_check
      _
    $region7: #{tpu_custom_call.1} parent=1 // pred_check_branch
      %22 = sbr.rel (0) target = $region9
    $region8: #{tpu_custom_call.1} parent=1 // pred_region
      _
    $region9: #{tpu_custom_call.1} parent=1 // pred_fallthru
      _
    // Predicated region
    $region10: #{tpu_custom_call.1} parent=1 // pred_check
      _
    $region11: #{tpu_custom_call.1} parent=1 // pred_check_branch
      %24 = sbr.rel (0) target = $region13
    $region12: #{tpu_custom_call.1} parent=1 // pred_region
      %25 = dma.done [#allocation3], 1024
    $region13: #{tpu_custom_call.1} parent=1 // pred_fallthru
      _
    %v27 = vld [vmem:[%s1] sm:$0x3]
    %v28 = vmul.f32 %v27, %v27
    %v29 = vpack.c.bf16 %v28, %v28
    %v30 = vunpack.c.l.bf16 %v29
    %v31 = vsub.f32 %v28, %v30
    %v32 = vpack.c.bf16 %v31, %v31
    %v33 = vld [vmem:[#allocation2] sm:$0xf]
    %v34 = vld [vmem:[#allocation2 + $0x4] sm:$0xf]
    %v35 = vld [vmem:[#allocation2 + $0x8] sm:$0xf]
    %v36 = vld [vmem:[#allocation2 + $0xc] sm:$0xf]
    %v37 = vld [vmem:[#allocation2 + $0x10] sm:$0xf]
    %v38 = vld [vmem:[#allocation2 + $0x14] sm:$0xf]
    %v39 = vld [vmem:[#allocation2 + $0x18] sm:$0xf]
    %v40 = vld [vmem:[#allocation2 + $0x1c] sm:$0xf]
    %v41 = vld [vmem:[#allocation2 + $0x20] sm:$0xf]
    %v42 = vld [vmem:[#allocation2 + $0x24] sm:$0xf]
    %v43 = vld [vmem:[#allocation2 + $0x28] sm:$0xf]
    %v44 = vld [vmem:[#allocation2 + $0x2c] sm:$0xf]
    %v45 = vld [vmem:[#allocation2 + $0x30] sm:$0xf]
    %v46 = vld [vmem:[#allocation2 + $0x34] sm:$0xf]
    %v47 = vld [vmem:[#allocation2 + $0x38] sm:$0xf]
    %v48 = vld [vmem:[#allocation2 + $0x3c] sm:$0xf]
    %v65 = vunpack.c.l.b16 %v33
    %v66 = vunpack.c.l.b16 %v34
    %v67 = vunpack.c.l.b16 %v35
    %v68 = vunpack.c.l.b16 %v36
    %v69 = vunpack.c.l.b16 %v37
    %v70 = vunpack.c.l.b16 %v38
    %v71 = vunpack.c.l.b16 %v39
    %v72 = vunpack.c.l.b16 %v40
    %v73 = vunpack.c.l.b16 %v41
    %v74 = vunpack.c.l.b16 %v42
    %v75 = vunpack.c.l.b16 %v43
    %v76 = vunpack.c.l.b16 %v44
    %v77 = vunpack.c.l.b16 %v45
    %v78 = vunpack.c.l.b16 %v46
    %v79 = vunpack.c.l.b16 %v47
    %v80 = vunpack.c.l.b16 %v48
    %v81 = vpack.c.b16 %v66, %v65
    %v82 = vpack.c.b16 %v68, %v67
    %v83 = vpack.c.b16 %v70, %v69
    %v84 = vpack.c.b16 %v72, %v71
    %v85 = vpack.c.b16 %v74, %v73
    %v86 = vpack.c.b16 %v76, %v75
    %v87 = vpack.c.b16 %v78, %v77
    %v88 = vpack.c.b16 %v80, %v79
    %97 = vmatprep.subr.bf16.mxu0 0
    %98 = vmatpush1.bf16.msra.mxu0 %v81
    %99 = vmatprep.subr.bf16.mxu0 0
    %100 = vmatpush1.bf16.msra.mxu0 %v82
    %101 = vmatprep.subr.bf16.mxu0 0
    %102 = vmatpush1.bf16.msra.mxu0 %v83
    %103 = vmatprep.subr.bf16.mxu0 0
    %104 = vmatpush1.bf16.msra.mxu0 %v84
    %105 = vmatprep.subr.bf16.mxu0 0
    %106 = vmatpush1.bf16.msra.mxu0 %v85
    %107 = vmatprep.subr.bf16.mxu0 0
    %108 = vmatpush1.bf16.msra.mxu0 %v86
    %109 = vmatprep.subr.bf16.mxu0 0
    %110 = vmatpush1.bf16.msra.mxu0 %v87
    %111 = vmatprep.subr.bf16.mxu0 0
    %112 = vmatpush1.bf16.msra.mxu0 %v88
    %113 = vmatprep.subr.bf16.mxu0 0
    %114 = vmatpush1.bf16.msra.mxu0 0
    %115 = vmatprep.subr.bf16.mxu0 0
    %116 = vmatpush1.bf16.msra.mxu0 0
    %117 = vmatprep.subr.bf16.mxu0 0
    %118 = vmatpush1.bf16.msra.mxu0 0
    %119 = vmatprep.subr.bf16.mxu0 0
    %120 = vmatpush1.bf16.msra.mxu0 0
    %121 = vmatprep.subr.bf16.mxu0 0
    %122 = vmatpush1.bf16.msra.mxu0 0
    %123 = vmatprep.subr.bf16.mxu0 0
    %124 = vmatpush1.bf16.msra.mxu0 0
    %125 = vmatprep.subr.bf16.mxu0 0
    %126 = vmatpush1.bf16.msra.mxu0 0
    %127 = vmatprep.subr.bf16.mxu0 0
    %128 = vmatpush1.bf16.msra.mxu0 0
    %129 = vmatprep.mubr.bf16.mxu0 0
    %130 = vmatmul.mubr.bf16.gmra.mrb[0].mxu0 %v32
    %v131 = vpop.f32.mrb[0].mxu0
    %v132 = vadd.f32 0.0, %v131
    %v133 = vpop.f32.mrb[0].mxu0
    %v134 = vpop.f32.mrb[0].mxu0
    %v135 = vpop.f32.mrb[0].mxu0
    %136 = vdwg.mxu0
    %137 = vmatprep.subr.bf16.mxu0 0
    %138 = vmatpush1.bf16.msra.mxu0 %v81
    %139 = vmatprep.subr.bf16.mxu0 0
    %140 = vmatpush1.bf16.msra.mxu0 %v82
    %141 = vmatprep.subr.bf16.mxu0 0
    %142 = vmatpush1.bf16.msra.mxu0 %v83
    %143 = vmatprep.subr.bf16.mxu0 0
    %144 = vmatpush1.bf16.msra.mxu0 %v84
    %145 = vmatprep.subr.bf16.mxu0 0
    %146 = vmatpush1.bf16.msra.mxu0 %v85
    %147 = vmatprep.subr.bf16.mxu0 0
    %148 = vmatpush1.bf16.msra.mxu0 %v86
    %149 = vmatprep.subr.bf16.mxu0 0
    %150 = vmatpush1.bf16.msra.mxu0 %v87
    %151 = vmatprep.subr.bf16.mxu0 0
    %152 = vmatpush1.bf16.msra.mxu0 %v88
    %153 = vmatprep.subr.bf16.mxu0 0
    %154 = vmatpush1.bf16.msra.mxu0 0
    %155 = vmatprep.subr.bf16.mxu0 0
    %156 = vmatpush1.bf16.msra.mxu0 0
    %157 = vmatprep.subr.bf16.mxu0 0
    %158 = vmatpush1.bf16.msra.mxu0 0
    %159 = vmatprep.subr.bf16.mxu0 0
    %160 = vmatpush1.bf16.msra.mxu0 0
    %161 = vmatprep.subr.bf16.mxu0 0
    %162 = vmatpush1.bf16.msra.mxu0 0
    %163 = vmatprep.subr.bf16.mxu0 0
    %164 = vmatpush1.bf16.msra.mxu0 0
    %165 = vmatprep.subr.bf16.mxu0 0
    %166 = vmatpush1.bf16.msra.mxu0 0
    %167 = vmatprep.subr.bf16.mxu0 0
    %168 = vmatpush1.bf16.msra.mxu0 0
    %169 = vmatprep.mubr.bf16.mxu0 0
    %170 = vmatmul.mubr.bf16.gmra.mrb[0].mxu0 %v29
    %v171 = vpop.f32.mrb[0].mxu0
    %v172 = vadd.f32 %v132, %v171
    %v173 = vpop.f32.mrb[0].mxu0
    %v174 = vpop.f32.mrb[0].mxu0
    %v175 = vpop.f32.mrb[0].mxu0
    %176 = vdwg.mxu0
    %v177 = vadd.f32 %v172, 1e-10
    %v178 = vrsqrt.pop %v177
    %v179 = vmul.f32 %v27, %v178
    %180 = vst [vmem:[#allocation5] sm:$0x3] %v179
    // Predicated region
    $region14: #{tpu_custom_call.1} parent=1 // pred_check
      _
    $region15: #{tpu_custom_call.1} parent=1 // pred_check_branch
      %182 = sbr.rel (0) target = $region17
    $region16: #{tpu_custom_call.1} parent=1 // pred_region
      %s184 = ssub.s32 32, 32
      %185 = vsyncadd [#allocation4], %s184
      %s187 = sshll.u32 [#allocation5], 4
      %s188 = int_to_ptr.vmem [resolvable:$true] %s187
      %190 = dma.vmem_to_hbm [thread:$0]  %s188, 32, %s2, [#allocation4]
    $region17: #{tpu_custom_call.1} parent=1 // pred_fallthru
      _
    // Predicated region
    $region18: #{tpu_custom_call.1} parent=1 // pred_check
      _
    $region19: #{tpu_custom_call.1} parent=1 // pred_check_branch
      %192 = sbr.rel (0) target = $region21
    $region20: #{tpu_custom_call.1} parent=1 // pred_region
      %193 = dma.done [#allocation4], 32
    $region21: #{tpu_custom_call.1} parent=1 // pred_fallthru
      _
    %194 = vsyncpa [#allocation3], 1
    %195 = vsyncpa [#allocation4], 1

</llo_original>
